<compile_context>
chip_gen: v7x
topology: tpu7x:2x2x1
jax: 0.10.0
libtpu: 0.0.40
codegen_flags: <defaults>
</compile_context>

<pallas_src>
import numpy as np
import jax
import jax.numpy as jnp
from jax.experimental import pallas as pl
from jax.experimental.pallas import tpu as pltpu


# ----------------------------- model constants -----------------------------
PATCH = 4                                  # ViT patch size
C_IN = 3                                   # image channels
IMG = 16                                   # image H = W
N_PATCH = (IMG // PATCH) * (IMG // PATCH)  # 16 patches
PATCH_DIM = C_IN * PATCH * PATCH           # 48 features per patch
D_IMG = 32                                 # image-encoder feature dim
D_LLM = 64                                 # llm hidden size
VOCAB = 256                                # llm vocab size
POOL_OUT = 128                             # AdaptiveAvgPool1d target length


# ----------------------------- Pallas kernels ------------------------------

def _fused_logits_kernel(patches_ref, poolP_ref, w_ref, b_ref, logits_ref):
    """Per batch element: patches (16,48) -> logits (128,256), all in VMEM."""
    # (16,48) @ (48,256) -> (16,256): folded patch-embed/aligner/lm_head weights
    h = jnp.dot(patches_ref[...], w_ref[...], preferred_element_type=jnp.float32)
    # (128,16) @ (16,256) + (1,256): AdaptiveAvgPool1d as a row-stochastic matrix;
    # bias added after the pool (exact, since pool rows sum to 1).
    logits_ref[...] = (
        jnp.dot(poolP_ref[...], h, preferred_element_type=jnp.float32) + b_ref[...]
    )


def _fused_logits_loss_kernel(patches_ref, poolP_ref, w_ref, b_ref, labels_ref,
                              logits_ref, loss_ref):
    """Same as above, plus fused per-row cross-entropy (lse - logits[label])."""
    h = jnp.dot(patches_ref[...], w_ref[...], preferred_element_type=jnp.float32)
    logits = jnp.dot(poolP_ref[...], h, preferred_element_type=jnp.float32) + b_ref[...]
    logits_ref[...] = logits                                   # lane-dense (128,256)

    m = jnp.max(logits, axis=-1, keepdims=True)
    lse = m + jnp.log(jnp.sum(jnp.exp(logits - m), axis=-1, keepdims=True))  # (128,1)
    col = jax.lax.broadcasted_iota(jnp.int32, logits.shape, 1)               # (128,256)
    picked = jnp.sum(jnp.where(col == labels_ref[...], logits, 0.0),
                     axis=-1, keepdims=True)                                 # (128,1)
    loss_ref[...] = lse - picked                                             # per-row CE


def _xent_kernel(logits_ref, labels_ref, loss_ref):
    """Standalone mean CE (fallback, only used when labels batch != image batch)."""
    logits = logits_ref[...]
    labels = labels_ref[...]
    m = jnp.max(logits, axis=-1, keepdims=True)
    lse = m + jnp.log(jnp.sum(jnp.exp(logits - m), axis=-1, keepdims=True))
    col = jax.lax.broadcasted_iota(jnp.int32, logits.shape, 1)
    picked = jnp.sum(jnp.where(col == labels, logits, 0.0), axis=-1, keepdims=True)
    loss_ref[0, 0] = jnp.mean(lse - picked)


# --------------------------- pallas_call wrappers ---------------------------

def fused_forward(patches, pool_P, w_all, b_all, labels=None):
    """patches (B,16,48) -> logits (B,128,256) [+ per-row CE (B,128,1)]."""
    B = patches.shape[0]
    compiler_params = pltpu.CompilerParams(dimension_semantics=("parallel",))
    in_specs = [
        pl.BlockSpec((None, N_PATCH, PATCH_DIM), lambda b: (b, 0, 0)),
        pl.BlockSpec((POOL_OUT, N_PATCH), lambda b: (0, 0)),
        pl.BlockSpec((PATCH_DIM, VOCAB), lambda b: (0, 0)),
        pl.BlockSpec((1, VOCAB), lambda b: (0, 0)),
    ]
    logits_spec = pl.BlockSpec((None, POOL_OUT, VOCAB), lambda b: (b, 0, 0))

    if labels is None:
        logits = pl.pallas_call(
            _fused_logits_kernel,
            grid=(B,),
            out_shape=jax.ShapeDtypeStruct((B, POOL_OUT, VOCAB), jnp.float32),
            in_specs=in_specs,
            out_specs=logits_spec,
            compiler_params=compiler_params,
        )(patches, pool_P, w_all, b_all)
        return logits, None

    labels3 = labels.astype(jnp.int32).reshape(B, POOL_OUT, 1)
    logits, per_row = pl.pallas_call(
        _fused_logits_loss_kernel,
        grid=(B,),
        out_shape=(
            jax.ShapeDtypeStruct((B, POOL_OUT, VOCAB), jnp.float32),
            jax.ShapeDtypeStruct((B, POOL_OUT, 1), jnp.float32),
        ),
        in_specs=in_specs + [pl.BlockSpec((None, POOL_OUT, 1), lambda b: (b, 0, 0))],
        out_specs=(logits_spec, pl.BlockSpec((None, POOL_OUT, 1), lambda b: (b, 0, 0))),
        compiler_params=compiler_params,
    )(patches, pool_P, w_all, b_all, labels3)
    return logits, per_row


def cross_entropy(logits, labels):
    """Fallback: logits (R,V) f32, labels (R,) int -> scalar mean CE loss."""
    R, V = logits.shape
    labels2d = labels.reshape(R, 1).astype(jnp.int32)
    out = pl.pallas_call(
        _xent_kernel,
        grid=(1,),
        out_shape=jax.ShapeDtypeStruct((1, 1), jnp.float32),
        in_specs=[
            pl.BlockSpec((R, V), lambda i: (0, 0)),
            pl.BlockSpec((R, 1), lambda i: (0, 0)),
        ],
        out_specs=pl.BlockSpec(memory_space=pltpu.MemorySpace.SMEM),
    )(logits, labels2d)
    return out[0, 0]


# ------------------------------- glue / model -------------------------------

def adaptive_avg_pool_matrix(n_in, n_out):
    """Matrix P (n_out, n_in) replicating nn.AdaptiveAvgPool1d bin semantics."""
    P = np.zeros((n_out, n_in), dtype=np.float32)
    for i in range(n_out):
        s = (i * n_in) // n_out
        e = -(-((i + 1) * n_in) // n_out)          # ceil div
        P[i, s:e] = 1.0 / (e - s)
    return jnp.asarray(P)


def extract_patches(images):
    """(B, C, H, W) NCHW -> (B, N_PATCH, C*P*P) patch rows (layout glue)."""
    B, C, H, W = images.shape
    p = PATCH
    x = images.reshape(B, C, H // p, p, W // p, p)
    x = x.transpose(0, 2, 4, 1, 3, 5)
    return x.reshape(B, (H // p) * (W // p), C * p * p)


def init_params(key):
    ks = jax.random.split(key, 6)
    scale = 0.02
    hi = jax.lax.Precision.HIGHEST
    # image_encoder stand-in: conv patch-embed expressed as a matmul
    # TODO(synk): the external image_encoder's full ViT transformer stack is
    # replaced by its patch-embedding projection.
    w_patch = scale * jax.random.normal(ks[0], (PATCH_DIM, D_IMG), jnp.float32)
    b_patch = scale * jax.random.normal(ks[1], (1, D_IMG), jnp.float32)
    # aligner: Linear(D_IMG -> D_LLM)
    w_align = scale * jax.random.normal(ks[2], (D_IMG, D_LLM), jnp.float32)
    b_align = scale * jax.random.normal(ks[3], (1, D_LLM), jnp.float32)
    # llm stand-in: token embedding + lm_head
    # TODO(synk): Qwen2 decoder layers (attention over attention_mask) are
    # replaced by embedding + lm_head; attention_mask is therefore unused.
    embed = scale * jax.random.normal(ks[4], (VOCAB, D_LLM), jnp.float32)  # dead (see forward)
    w_lm = scale * jax.random.normal(ks[5], (D_LLM, VOCAB), jnp.float32)
    b_lm = jnp.zeros((1, VOCAB), jnp.float32)

    # One-time exact algebraic fold of the all-linear chain
    # patch-embed -> aligner -> (pool) -> lm_head.  Pool commutes because its
    # matrix is row-stochastic, so the bias folds through unchanged.
    w_pa = jnp.dot(w_patch, w_align, precision=hi)                  # (48, 64)
    b_pa = jnp.dot(b_patch, w_align, precision=hi) + b_align        # (1, 64)
    w_all = jnp.dot(w_pa, w_lm, precision=hi)                       # (48, 256)
    b_all = jnp.dot(b_pa, w_lm, precision=hi) + b_lm                # (1, 256)

    return {
        "w_patch": w_patch, "b_patch": b_patch,
        "w_align": w_align, "b_align": b_align,
        "embed": embed,
        "w_lm": w_lm, "b_lm": b_lm,
        "w_all": w_all, "b_all": b_all,
        "pool_P": adaptive_avg_pool_matrix(N_PATCH, POOL_OUT),      # (128, 16)
    }


def multimodal_forward(params, input_ids, attention_mask, image_A, image_B, labels=None):
    # The reference's truncate-to-128 chain keeps only pooled_A:
    #   cat([pooled_A, pooled_B])[:, :128]         == pooled_A
    #   cat([pooled_A, inputs_embeds])[:, :128]    == pooled_A
    # so the image_B encoder/aligner/pool path, the input_ids embedding lookup
    # and attention_mask never influence the returned logits/loss; they are
    # skipped here (identical outputs, ~half the matmul work).
    del image_B, input_ids, attention_mask
    B = image_A.shape[0]
    patches_A = extract_patches(image_A)                            # (B, 16, 48)

    if labels is not None and labels.shape[0] == B:
        logits, per_row = fused_forward(
            patches_A, params["pool_P"], params["w_all"], params["b_all"], labels=labels)
        loss = jnp.mean(per_row)                                    # mean over B*128 rows
        return loss, logits

    logits, _ = fused_forward(
        patches_A, params["pool_P"], params["w_all"], params["b_all"], labels=None)
    if labels is not None:
        # batch-size adjust exactly as the reference (slice / zero-pad rows)
        Bl = labels.shape[0]
        if B > Bl:
            logits_l = logits[:Bl]
        else:
            pad = jnp.zeros((Bl - B,) + logits.shape[1:], logits.dtype)
            logits_l = jnp.concatenate([logits, pad], axis=0)
        loss = cross_entropy(logits_l.reshape(-1, VOCAB), labels.reshape(-1))
        return loss, logits
    return logits


# ------------------------ pure-JAX reference (unfused) -----------------------

def reference_forward(params, image_A, labels):
    hi = jax.lax.Precision.HIGHEST
    patches = extract_patches(image_A)                                           # (B,16,48)
    feats = jnp.einsum("bpf,fd->bpd", patches, params["w_patch"], precision=hi) + params["b_patch"]
    aligned = jnp.einsum("bpd,de->bpe", feats, params["w_align"], precision=hi) + params["b_align"]
    pooled = jnp.einsum("op,bpe->boe", params["pool_P"], aligned, precision=hi)  # (B,128,64)
    logits = jnp.einsum("boe,ev->bov", pooled, params["w_lm"], precision=hi) + params["b_lm"]
    logp = jax.nn.log_softmax(logits, axis=-1)
    picked = jnp.take_along_axis(logp, labels[..., None].astype(jnp.int32), axis=-1)[..., 0]
    return -jnp.mean(picked), logits


# ---------------------------------- main ------------------------------------

if __name__ == "__main__":
    key = jax.random.PRNGKey(0)
    k_img_a, k_img_b, k_ids, k_lbl, k_params = jax.random.split(key, 5)

    B = 2
    SEQ = 136  # > 128 so the reference truncation branch is the one modelled

    params = init_params(k_params)

    image_A = jax.random.normal(k_img_a, (B, C_IN, IMG, IMG), jnp.float32)
    image_B = jax.random.normal(k_img_b, (B, C_IN, IMG, IMG), jnp.float32)
    input_ids = jax.random.randint(k_ids, (B, SEQ), 0, VOCAB, dtype=jnp.int32)
    attention_mask = jnp.ones((B, SEQ), jnp.int32)
    labels = jax.random.randint(k_lbl, (B, POOL_OUT), 0, VOCAB, dtype=jnp.int32)

    fwd = jax.jit(multimodal_forward)
    loss, logits = fwd(params, input_ids, attention_mask, image_A, image_B, labels)
    jax.block_until_ready((loss, logits))

    assert logits.shape == (B, POOL_OUT, VOCAB)
    assert bool(jnp.isfinite(loss))

    # correctness check against the unfused pure-JAX reference (loose tolerance
    # to accommodate MXU f32 accumulation-order differences from the fold)
    ref_loss, ref_logits = reference_forward(params, image_A, labels)
    np.testing.assert_allclose(np.asarray(logits), np.asarray(ref_logits),
                               rtol=2e-2, atol=2e-3)
    np.testing.assert_allclose(float(loss), float(ref_loss), rtol=1e-2, atol=1e-3)

    print("KERNEL_OK")
</pallas_src>

<mosaic_0001>
module attributes {stable_mosaic.version = 11 : i64} {
  func.func @_fused_logits_loss_kernel(%arg0: i32, %arg1: memref<1x16x48xf32, #tpu.memory_space<vmem>>, %arg2: memref<128x16xf32, #tpu.memory_space<vmem>>, %arg3: memref<48x256xf32, #tpu.memory_space<vmem>>, %arg4: memref<1x256xf32, #tpu.memory_space<vmem>>, %arg5: memref<1x128x1xi32, #tpu.memory_space<vmem>>, %arg6: memref<1x128x256xf32, #tpu.memory_space<vmem>>, %arg7: memref<1x128x1xf32, #tpu.memory_space<vmem>>) attributes {dimension_semantics = [#tpu.dimension_semantics<parallel>], iteration_bounds = array<i64: 2>, scalar_prefetch = 0 : i64, scratch_operands = 0 : i64, tpu.core_type = #tpu.core_type<tc>, window_params = [{transform_indices = @transform_0, window_bounds = array<i64: 1, 16, 48>}, {pipeline_mode = #tpu.pipeline_mode<synchronous>, transform_indices = @transform_1, window_bounds = array<i64: 128, 16>}, {pipeline_mode = #tpu.pipeline_mode<synchronous>, transform_indices = @transform_2, window_bounds = array<i64: 48, 256>}, {pipeline_mode = #tpu.pipeline_mode<synchronous>, transform_indices = @transform_3, window_bounds = array<i64: 1, 256>}, {transform_indices = @transform_4, window_bounds = array<i64: 1, 128, 1>}, {transform_indices = @transform_5, window_bounds = array<i64: 1, 128, 256>}, {transform_indices = @transform_6, window_bounds = array<i64: 1, 128, 1>}]} {
    %c0 = arith.constant 0 : index
    %c0_0 = arith.constant 0 : index
    %c0_1 = arith.constant 0 : index
    %0 = vector.load %arg1[%c0, %c0_0, %c0_1] : memref<1x16x48xf32, #tpu.memory_space<vmem>>, vector<1x16x48xf32>
    %1 = vector.shape_cast %0 : vector<1x16x48xf32> to vector<16x48xf32>
    %c0_2 = arith.constant 0 : index
    %c0_3 = arith.constant 0 : index
    %2 = vector.load %arg3[%c0_2, %c0_3] : memref<48x256xf32, #tpu.memory_space<vmem>>, vector<48x256xf32>
    %cst = arith.constant dense<0.000000e+00> : vector<16x256xf32>
    %3 = tpu.matmul %1, %2, %cst {dimension_numbers = #tpu.dot_dimension_numbers<[1], [0], [0], [1], [0, 0, 1, 1], [], []>} : vector<16x48xf32>, vector<48x256xf32>, vector<16x256xf32> -> vector<16x256xf32>
    %c0_4 = arith.constant 0 : index
    %c0_5 = arith.constant 0 : index
    %4 = vector.load %arg2[%c0_4, %c0_5] : memref<128x16xf32, #tpu.memory_space<vmem>>, vector<128x16xf32>
    %cst_6 = arith.constant dense<0.000000e+00> : vector<128x256xf32>
    %5 = tpu.matmul %4, %3, %cst_6 {dimension_numbers = #tpu.dot_dimension_numbers<[1], [0], [0], [1], [0, 0, 1, 1], [], []>} : vector<128x16xf32>, vector<16x256xf32>, vector<128x256xf32> -> vector<128x256xf32>
    %c0_7 = arith.constant 0 : index
    %c0_8 = arith.constant 0 : index
    %6 = vector.load %arg4[%c0_7, %c0_8] : memref<1x256xf32, #tpu.memory_space<vmem>>, vector<1x256xf32>
    %7 = vector.broadcast %6 : vector<1x256xf32> to vector<128x256xf32>
    %8 = arith.addf %5, %7 : vector<128x256xf32>
    %c0_9 = arith.constant 0 : index
    %c0_10 = arith.constant 0 : index
    %c0_11 = arith.constant 0 : index
    %9 = vector.load %arg6[%c0_9, %c0_10, %c0_11] : memref<1x128x256xf32, #tpu.memory_space<vmem>>, vector<1x128x256xf32>
    %10 = vector.shape_cast %9 : vector<1x128x256xf32> to vector<128x256xf32>
    %11 = vector.shape_cast %8 : vector<128x256xf32> to vector<1x128x256xf32>
    tpu.vector_store %arg6[%c0_9, %c0_10, %c0_11], %11 {strides = array<i32>} : memref<1x128x256xf32, #tpu.memory_space<vmem>>, vector<1x128x256xf32>,
    %cst_12 = arith.constant dense<0xFF800000> : vector<128xf32>
    %12 = vector.multi_reduction <maximumf>, %8, %cst_12 [1] : vector<128x256xf32> to vector<128xf32>
    %13 = vector.shape_cast %12 : vector<128xf32> to vector<128x1xf32>
    %14 = vector.broadcast %13 : vector<128x1xf32> to vector<128x256xf32>
    %15 = arith.subf %8, %14 : vector<128x256xf32>
    %16 = math.exp %15 : vector<128x256xf32>
    %cst_13 = arith.constant dense<0.000000e+00> : vector<128xf32>
    %17 = vector.multi_reduction <add>, %16, %cst_13 [1] : vector<128x256xf32> to vector<128xf32>
    %18 = vector.shape_cast %17 : vector<128xf32> to vector<128x1xf32>
    %19 = math.log %18 : vector<128x1xf32>
    %20 = arith.addf %13, %19 : vector<128x1xf32>
    %21 = tpu.iota {dimensions = array<i32: 1>} : vector<128x256xi32>
    %c0_14 = arith.constant 0 : index
    %c0_15 = arith.constant 0 : index
    %c0_16 = arith.constant 0 : index
    %22 = vector.load %arg5[%c0_14, %c0_15, %c0_16] : memref<1x128x1xi32, #tpu.memory_space<vmem>>, vector<1x128x1xi32>
    %23 = vector.shape_cast %22 : vector<1x128x1xi32> to vector<128x1xi32>
    %24 = vector.broadcast %23 : vector<128x1xi32> to vector<128x256xi32>
    %25 = arith.cmpi eq, %21, %24 : vector<128x256xi32>
    %cst_17 = arith.constant 0.000000e+00 : f32
    %26 = vector.broadcast %cst_17 : f32 to vector<128x256xf32>
    %27 = arith.select %25, %8, %26 : vector<128x256xi1>, vector<128x256xf32>
    %cst_18 = arith.constant dense<0.000000e+00> : vector<128xf32>
    %28 = vector.multi_reduction <add>, %27, %cst_18 [1] : vector<128x256xf32> to vector<128xf32>
    %29 = vector.shape_cast %28 : vector<128xf32> to vector<128x1xf32>
    %30 = arith.subf %20, %29 : vector<128x1xf32>
    %c0_19 = arith.constant 0 : index
    %c0_20 = arith.constant 0 : index
    %c0_21 = arith.constant 0 : index
    %31 = vector.load %arg7[%c0_19, %c0_20, %c0_21] : memref<1x128x1xf32, #tpu.memory_space<vmem>>, vector<1x128x1xf32>
    %32 = vector.shape_cast %31 : vector<1x128x1xf32> to vector<128x1xf32>
    %33 = vector.shape_cast %30 : vector<128x1xf32> to vector<1x128x1xf32>
    tpu.vector_store %arg7[%c0_19, %c0_20, %c0_21], %33 {strides = array<i32>} : memref<1x128x1xf32, #tpu.memory_space<vmem>>, vector<1x128x1xf32>,
    return
  }
  func.func @transform_0(%arg0: i32) -> (i32, i32, i32) {
    %c0_i32 = arith.constant 0 : i32
    %c0_i32_0 = arith.constant 0 : i32
    %c0_i32_1 = arith.constant 0 : i32
    return %arg0, %c0_i32, %c0_i32_0 : i32, i32, i32
  }
  func.func @transform_1(%arg0: i32) -> (i32, i32) {
    %c0_i32 = arith.constant 0 : i32
    %c0_i32_0 = arith.constant 0 : i32
    %c0_i32_1 = arith.constant 0 : i32
    return %c0_i32, %c0_i32_0 : i32, i32
  }
  func.func @transform_2(%arg0: i32) -> (i32, i32) {
    %c0_i32 = arith.constant 0 : i32
    %c0_i32_0 = arith.constant 0 : i32
    %c0_i32_1 = arith.constant 0 : i32
    return %c0_i32, %c0_i32_0 : i32, i32
  }
  func.func @transform_3(%arg0: i32) -> (i32, i32) {
    %c0_i32 = arith.constant 0 : i32
    %c0_i32_0 = arith.constant 0 : i32
    %c0_i32_1 = arith.constant 0 : i32
    return %c0_i32, %c0_i32_0 : i32, i32
  }
  func.func @transform_4(%arg0: i32) -> (i32, i32, i32) {
    %c0_i32 = arith.constant 0 : i32
    %c0_i32_0 = arith.constant 0 : i32
    %c0_i32_1 = arith.constant 0 : i32
    return %arg0, %c0_i32, %c0_i32_0 : i32, i32, i32
  }
  func.func @transform_5(%arg0: i32) -> (i32, i32, i32) {
    %c0_i32 = arith.constant 0 : i32
    %c0_i32_0 = arith.constant 0 : i32
    %c0_i32_1 = arith.constant 0 : i32
    return %arg0, %c0_i32, %c0_i32_0 : i32, i32, i32
  }
  func.func @transform_6(%arg0: i32) -> (i32, i32, i32) {
    %c0_i32 = arith.constant 0 : i32
    %c0_i32_0 = arith.constant 0 : i32
    %c0_i32_1 = arith.constant 0 : i32
    return %arg0, %c0_i32, %c0_i32_0 : i32, i32, i32
  }
}

</mosaic_0001>

<llo_original>
// kernel: multimodal_forward.1
$region0: #{multimodal_forward.1}
  #allocation0 [shape = 'u32[]', space=smem, size = 0x4, offset = 0x4, fixed_abs, tag = 'smem constant byte address 0x4 - core index']
  #allocation1 [shape = 'u32[144,128]{1,0:T(1,128)}', space=vmem, size = 0x12000, scoped, tag = 'internal scratch']
  %s0 = inlined_call_operand.vmem [shape: f32[2,16,48], index: 0, kind: input, shape index: {}]
  %s1 = inlined_call_operand.vmem [shape: f32[128,16], index: 1, kind: input, shape index: {}]
  %s2 = inlined_call_operand.vmem [shape: f32[48,256], index: 2, kind: input, shape index: {}]
  %s3 = inlined_call_operand.vmem [shape: f32[1,256], index: 3, kind: input, shape index: {}]
  %s4 = inlined_call_operand.vmem [shape: s32[2,128,1], index: 4, kind: input, shape index: {}]
  %s5 = inlined_call_operand.hbm [shape: f32[2,128,256], index: 5, kind: output, shape index: {0}]
  %s6 = inlined_call_operand.vmem [shape: f32[2,128,1], index: 6, kind: output, shape index: {1}]
  %7 = xla_tuple %s5, %s6
  %s8 = sld [smem:[#allocation0]]
  $region61: #{multimodal_forward.1} parent=0
    _
  %s10 = ssub.s32 1, %s8
  %s11 = scalar_select 0, %s10, %s8
  $region1: #{multimodal_forward.1} parent=0
    #allocation2 [shape = 'u8[262144]{0}', space=vmem, size = 0x40000, scoped, tag = 'output window, operand 0']
    #allocation3 [shape = 's32[2]{0}', space=sflag, size = 0x8, scoped, tag = 'scoped memory for multimodal_forward.1']
    %12 = vsyncpa [#allocation3], 0
    %s13 = scalar_lea.sflag [#allocation3], 1
    %14 = vsyncpa %s13, 0
    loop: start=0, step=1, limit=4
    $region2: #{multimodal_forward.1} parent=1 // loop_pre_header
      _
    $region3: #{multimodal_forward.1} parent=1 // loop_header
      %s16 = sphi 0, %s20
      %p17 = scmp.ge.s32.totalorder %s16, 4
      %s26 = sphi 0, %s28
      %s29 = sphi 0, %s26
      %s30 = sphi 0, %s29
      %s46 = sphi 0, %s30
      %s50 = sphi 0, %s50
      %s52 = sphi 0, %s50
      %s53 = sphi 0, %s52
      %s67 = sphi 0, %s53
      %s71 = sphi 0, %s71
      %s73 = sphi 0, %s71
      %s74 = sphi 0, %s73
      %s88 = sphi 0, %s74
      %s92 = sphi 0, %s92
      %s94 = sphi 0, %s92
      %s95 = sphi 0, %s94
      %s109 = sphi 0, %s95
      %s115 = sphi 0, %s117
      %s118 = sphi 0, %s115
      %s119 = sphi 0, %s118
      %s135 = sphi 0, %s119
      %s141 = sphi 0, %s143
      %s144 = sphi 0, %s141
      %s145 = sphi 0, %s144
      %s161 = sphi 0, %s145
      %s167 = sphi 0, %s169
      %s170 = sphi 0, %s167
      %s171 = sphi 0, %s170
      %s187 = sphi 0, %s171
    $region4: #{multimodal_forward.1} parent=1 // loop_header_branch
      %19 = sbr.rel (%p17) target = $region8
    $region5: #{multimodal_forward.1} parent=1 // loop_body
      %s21 = ssub.s32 %s16, 1
      %s22 = ssub.s32 %s16, 2
      %s23 = sadd.s32 %s16, 1
      %s24 = ssub.s32 %s16, %s23
      %p25 = scmp.eq.s32.totalorder %s24, 0
      %s27 = sadd.s32 %s26, 1
      %s28 = scalar_select %p25, %s26, %s27
      %p31 = pneg %p25
      %p32 = scmp.eq.s32.totalorder %s16, 1
      %p33 = por %p31, %p32
      %p34 = scmp.ne.s32.totalorder %s26, %s29
      %p35 = scmp.eq.s32.totalorder %s16, 0
      %p36 = por %p34, %p35
      %p37 = scmp.ne.s32.totalorder %s26, %s29
      %p38 = scmp.eq.s32.totalorder %s21, 1
      %p39 = por %p37, %p38
      %p40 = scmp.ne.s32.totalorder %s29, %s30
      %p41 = scmp.eq.s32.totalorder %s21, 0
      %p42 = por %p40, %p41
      %p43 = scmp.ne.s32.totalorder %s29, %s30
      %p44 = scmp.eq.s32.totalorder %s22, 1
      %p45 = por %p43, %p44
      %p47 = scmp.ne.s32.totalorder %s30, %s46
      %p48 = scmp.eq.s32.totalorder %s22, 0
      %p49 = por %p47, %p48
      %s51 = sadd.s32 %s50, 1
      %p54 = scmp.eq.s32.totalorder %s16, 1
      %p55 = scmp.ne.s32.totalorder %s50, %s52
      %p56 = scmp.eq.s32.totalorder %s16, 0
      %p57 = por %p55, %p56
      %p58 = scmp.ne.s32.totalorder %s50, %s52
      %p59 = scmp.eq.s32.totalorder %s21, 1
      %p60 = por %p58, %p59
      %p61 = scmp.ne.s32.totalorder %s52, %s53
      %p62 = scmp.eq.s32.totalorder %s21, 0
      %p63 = por %p61, %p62
      %p64 = scmp.ne.s32.totalorder %s52, %s53
      %p65 = scmp.eq.s32.totalorder %s22, 1
      %p66 = por %p64, %p65
      %p68 = scmp.ne.s32.totalorder %s53, %s67
      %p69 = scmp.eq.s32.totalorder %s22, 0
      %p70 = por %p68, %p69
      %s72 = sadd.s32 %s71, 1
      %p75 = scmp.eq.s32.totalorder %s16, 1
      %p76 = scmp.ne.s32.totalorder %s71, %s73
      %p77 = scmp.eq.s32.totalorder %s16, 0
      %p78 = por %p76, %p77
      %p79 = scmp.ne.s32.totalorder %s71, %s73
      %p80 = scmp.eq.s32.totalorder %s21, 1
      %p81 = por %p79, %p80
      %p82 = scmp.ne.s32.totalorder %s73, %s74
      %p83 = scmp.eq.s32.totalorder %s21, 0
      %p84 = por %p82, %p83
      %p85 = scmp.ne.s32.totalorder %s73, %s74
      %p86 = scmp.eq.s32.totalorder %s22, 1
      %p87 = por %p85, %p86
      %p89 = scmp.ne.s32.totalorder %s74, %s88
      %p90 = scmp.eq.s32.totalorder %s22, 0
      %p91 = por %p89, %p90
      %s93 = sadd.s32 %s92, 1
      %p96 = scmp.eq.s32.totalorder %s16, 1
      %p97 = scmp.ne.s32.totalorder %s92, %s94
      %p98 = scmp.eq.s32.totalorder %s16, 0
      %p99 = por %p97, %p98
      %p100 = scmp.ne.s32.totalorder %s92, %s94
      %p101 = scmp.eq.s32.totalorder %s21, 1
      %p102 = por %p100, %p101
      %p103 = scmp.ne.s32.totalorder %s94, %s95
      %p104 = scmp.eq.s32.totalorder %s21, 0
      %p105 = por %p103, %p104
      %p106 = scmp.ne.s32.totalorder %s94, %s95
      %p107 = scmp.eq.s32.totalorder %s22, 1
      %p108 = por %p106, %p107
      %p110 = scmp.ne.s32.totalorder %s95, %s109
      %p111 = scmp.eq.s32.totalorder %s22, 0
      %p112 = por %p110, %p111
      %s113 = ssub.s32 %s16, %s23
      %p114 = scmp.eq.s32.totalorder %s113, 0
      %s116 = sadd.s32 %s115, 1
      %s117 = scalar_select %p114, %s115, %s116
      %p120 = pneg %p114
      %p121 = scmp.eq.s32.totalorder %s16, 1
      %p122 = por %p120, %p121
      %p123 = scmp.ne.s32.totalorder %s115, %s118
      %p124 = scmp.eq.s32.totalorder %s16, 0
      %p125 = por %p123, %p124
      %p126 = scmp.ne.s32.totalorder %s115, %s118
      %p127 = scmp.eq.s32.totalorder %s21, 1
      %p128 = por %p126, %p127
      %p129 = scmp.ne.s32.totalorder %s118, %s119
      %p130 = scmp.eq.s32.totalorder %s21, 0
      %p131 = por %p129, %p130
      %p132 = scmp.ne.s32.totalorder %s118, %s119
      %p133 = scmp.eq.s32.totalorder %s22, 1
      %p134 = por %p132, %p133
      %p136 = scmp.ne.s32.totalorder %s119, %s135
      %p137 = scmp.eq.s32.totalorder %s22, 0
      %p138 = por %p136, %p137
      %s139 = ssub.s32 %s16, %s23
      %p140 = scmp.eq.s32.totalorder %s139, 0
      %s142 = sadd.s32 %s141, 1
      %s143 = scalar_select %p140, %s141, %s142
      %p146 = pneg %p140
      %p147 = scmp.eq.s32.totalorder %s16, 1
      %p148 = por %p146, %p147
      %p149 = scmp.ne.s32.totalorder %s141, %s144
      %p150 = scmp.eq.s32.totalorder %s16, 0
      %p151 = por %p149, %p150
      %p152 = scmp.ne.s32.totalorder %s141, %s144
      %p153 = scmp.eq.s32.totalorder %s21, 1
      %p154 = por %p152, %p153
      %p155 = scmp.ne.s32.totalorder %s144, %s145
      %p156 = scmp.eq.s32.totalorder %s21, 0
      %p157 = por %p155, %p156
      %p158 = scmp.ne.s32.totalorder %s144, %s145
      %p159 = scmp.eq.s32.totalorder %s22, 1
      %p160 = por %p158, %p159
      %p162 = scmp.ne.s32.totalorder %s145, %s161
      %p163 = scmp.eq.s32.totalorder %s22, 0
      %p164 = por %p162, %p163
      %s165 = ssub.s32 %s16, %s23
      %p166 = scmp.eq.s32.totalorder %s165, 0
      %s168 = sadd.s32 %s167, 1
      %s169 = scalar_select %p166, %s167, %s168
      %p172 = pneg %p166
      %p173 = scmp.eq.s32.totalorder %s16, 1
      %p174 = por %p172, %p173
      %p175 = scmp.ne.s32.totalorder %s167, %s170
      %p176 = scmp.eq.s32.totalorder %s16, 0
      %p177 = por %p175, %p176
      %p178 = scmp.ne.s32.totalorder %s167, %s170
      %p179 = scmp.eq.s32.totalorder %s21, 1
      %p180 = por %p178, %p179
      %p181 = scmp.ne.s32.totalorder %s170, %s171
      %p182 = scmp.eq.s32.totalorder %s21, 0
      %p183 = por %p181, %p182
      %p184 = scmp.ne.s32.totalorder %s170, %s171
      %p185 = scmp.eq.s32.totalorder %s22, 1
      %p186 = por %p184, %p185
      %p188 = scmp.ne.s32.totalorder %s171, %s187
      %p189 = scmp.eq.s32.totalorder %s22, 0
      %p190 = por %p188, %p189
      %p191 = scmp.le.s32.totalorder 1, %s16
      %p192 = scmp.lt.s32.totalorder %s16, 3
      %p193 = pnand %p191, %p192
      %p194 = pneg %p193
      // Predicated region
      $region9: #{multimodal_forward.1} parent=5 // pred_check
        _
      $region10: #{multimodal_forward.1} parent=5 // pred_check_branch
        %196 = sbr.rel (%p193) target = $region12
      $region11: #{multimodal_forward.1} parent=5 // pred_region
        %s197 = ssub.s32 %s16, 1
        // Predicated region
        $region13: #{multimodal_forward.1} parent=11 // pred_check
          %p198 = pneg %p63
        $region14: #{multimodal_forward.1} parent=11 // pred_check_branch
          %200 = sbr.rel (%p198) target = $region16
        $region15: #{multimodal_forward.1} parent=11 // pred_region
          _
        $region16: #{multimodal_forward.1} parent=11 // pred_fallthru
          _
        // Predicated region
        $region17: #{multimodal_forward.1} parent=11 // pred_check
          %p201 = pneg %p84
        $region18: #{multimodal_forward.1} parent=11 // pred_check_branch
          %203 = sbr.rel (%p201) target = $region20
        $region19: #{multimodal_forward.1} parent=11 // pred_region
          _
        $region20: #{multimodal_forward.1} parent=11 // pred_fallthru
          _
        // Predicated region
        $region21: #{multimodal_forward.1} parent=11 // pred_check
          %p204 = pneg %p105
        $region22: #{multimodal_forward.1} parent=11 // pred_check_branch
          %206 = sbr.rel (%p204) target = $region24
        $region23: #{multimodal_forward.1} parent=11 // pred_region
          _
        $region24: #{multimodal_forward.1} parent=11 // pred_fallthru
          _
      $region12: #{multimodal_forward.1} parent=5 // pred_fallthru
        _
      %p207 = scmp.lt.s32.totalorder %s16, 2
      // Predicated region
      $region25: #{multimodal_forward.1} parent=5 // pred_check
        %p208 = pneg %p207
      $region26: #{multimodal_forward.1} parent=5 // pred_check_branch
        %210 = sbr.rel (%p208) target = $region28
      $region27: #{multimodal_forward.1} parent=5 // pred_region
        // Predicated region
        $region29: #{multimodal_forward.1} parent=27 // pred_check
          %p211 = pneg %p36
        $region30: #{multimodal_forward.1} parent=27 // pred_check_branch
          %213 = sbr.rel (%p211) target = $region32
        $region31: #{multimodal_forward.1} parent=27 // pred_region
          %p214 = scmp.lt.s32.totalorder %s16, 1
          %s215 = scalar_select %p214, %s16, 1
          %s216 = smul.addr %s215, 2
          %s217 = smul.addr %s216, 8
          %s218 = scalar_lea.vmem %s0, %s217
        $region32: #{multimodal_forward.1} parent=27 // pred_fallthru
          _
        // Predicated region
        $region33: #{multimodal_forward.1} parent=27 // pred_check
          %p219 = pneg %p125
        $region34: #{multimodal_forward.1} parent=27 // pred_check_branch
          %221 = sbr.rel (%p219) target = $region36
        $region35: #{multimodal_forward.1} parent=27 // pred_region
          %p222 = scmp.lt.s32.totalorder %s16, 1
          %s223 = scalar_select %p222, %s16, 1
          %s224 = smul.addr %s223, 16
          %s225 = smul.addr %s224, 8
          %s226 = scalar_lea.vmem %s4, %s225
        $region36: #{multimodal_forward.1} parent=27 // pred_fallthru
          _
      $region28: #{multimodal_forward.1} parent=5 // pred_fallthru
        _
      %p227 = scmp.le.s32.totalorder 1, %s16
      %p228 = scmp.lt.s32.totalorder %s16, 3
      %p229 = pnand %p227, %p228
      %p230 = pneg %p229
      // Predicated region
      $region37: #{multimodal_forward.1} parent=5 // pred_check
        _
      $region38: #{multimodal_forward.1} parent=5 // pred_check_branch
        %232 = sbr.rel (%p229) target = $region40
      $region39: #{multimodal_forward.1} parent=5 // pred_region
        %s233 = ssub.s32 %s16, 1
        %p234 = scmp.lt.s32.totalorder %s21, 1
        %s235 = scalar_select %p234, %s21, 1
        %s236 = smul.addr %s235, 2
        %s237 = smul.addr %s236, 8
        %s238 = scalar_lea.vmem %s0, %s237
        %p239 = pneg %p42
        %p240 = pneg %p39
        %p241 = pneg %p63
        %p242 = pneg %p60
        %p243 = pneg %p84
        %p244 = pneg %p81
        %p245 = pneg %p105
        %p246 = pneg %p102
        %p247 = scmp.lt.s32.totalorder %s21, 1
        %s248 = scalar_select %p247, %s21, 1
        %s249 = smul.addr %s248, 16
        %s250 = smul.addr %s249, 8
        %s251 = scalar_lea.vmem %s4, %s250
        %p252 = pneg %p131
        %p253 = pneg %p128
        %p254 = pneg %p157
        %p255 = pneg %p154
        %s256 = sand.u32 %s144, 1
        %s257 = scalar_lea.sflag [#allocation3], %s256
        %s258 = sand.u32 %s144, 1
        %s259 = smul.addr %s258, 256
        %s260 = scalar_lea.vmem [#allocation2], %s259
        %p261 = pneg %p183
        %p262 = pneg %p180
        %p263 = scmp.lt.s32.totalorder %s21, 1
        %s264 = scalar_select %p263, %s21, 1
        %s265 = smul.addr %s264, 16
        %s266 = smul.addr %s265, 8
        %s267 = scalar_lea.vmem %s6, %s266
        %p268 = scmp.lt.s32.totalorder %s21, 1
        %s269 = scalar_select %p268, %s21, 1
        %s270 = smul.addr %s269, 2
        %s271 = smul.addr %s270, 8
        %s272 = scalar_lea.vmem %s0, %s271
        %p273 = scmp.lt.s32.totalorder %s21, 1
        %s274 = scalar_select %p273, %s21, 1
        %s275 = smul.addr %s274, 16
        %s276 = smul.addr %s275, 8
        %s277 = scalar_lea.vmem %s4, %s276
        %p278 = scmp.lt.s32.totalorder %s21, 1
        %s279 = scalar_select %p278, %s21, 1
        %s280 = smul.addr %s279, 16
        %s281 = smul.addr %s280, 8
        %s282 = scalar_lea.vmem %s6, %s281
        %v283 = vld [vmem:[%s272] sm:$0xff]
        %v284 = vld [vmem:[%s272 + $0x8] sm:$0xff]
        %v285 = vld [vmem:[%s2] sm:$0xff]
        %v286 = vld [vmem:[%s2 + $0x8] sm:$0xff]
        %v287 = vld [vmem:[%s2 + $0x10] sm:$0xff]
        %v288 = vld [vmem:[%s2 + $0x18] sm:$0xff]
        %v289 = vld [vmem:[%s2 + $0x20] sm:$0xff]
        %v290 = vld [vmem:[%s2 + $0x28] sm:$0xff]
        %v291 = vld [vmem:[%s2 + $0x30] sm:$0xff]
        %v292 = vld [vmem:[%s2 + $0x38] sm:$0xff]
        %v293 = vld [vmem:[%s2 + $0x40] sm:$0xff]
        %v294 = vld [vmem:[%s2 + $0x48] sm:$0xff]
        %v295 = vld [vmem:[%s2 + $0x50] sm:$0xff]
        %v296 = vld [vmem:[%s2 + $0x58] sm:$0xff]
        %vm297 = vcmask 392192
        %v299 = vsel %vm297, %v283, 0
        %v302 = vsel %vm297, %v284, 0
        %304 = vmatprep.subr.mxu0 %v286
        %305 = vmatpush1.msra.mxu0 %v285
        %306 = vmatprep.subr.mxu0 %v288
        %307 = vmatpush1.msra.mxu0 %v287
        %308 = vmatprep.subr.mxu0 %v290
        %309 = vmatpush1.msra.mxu0 %v289
        %310 = vmatprep.subr.mxu0 %v292
        %311 = vmatpush1.msra.mxu0 %v291
        %312 = vmatprep.subr.mxu0 %v294
        %313 = vmatpush1.msra.mxu0 %v293
        %314 = vmatprep.subr.mxu0 %v296
        %315 = vmatpush1.msra.mxu0 %v295
        %316 = vmatprep.subr.mxu0 0.0
        %317 = vmatpush1.msra.mxu0 0.0
        %318 = vmatprep.subr.mxu0 0.0
        %319 = vmatpush1.msra.mxu0 0.0
        %320 = vmatprep.subr.mxu0 0.0
        %321 = vmatpush1.msra.mxu0 0.0
        %322 = vmatprep.subr.mxu0 0.0
        %323 = vmatpush1.msra.mxu0 0.0
        %324 = vmatprep.subr.mxu0 0.0
        %325 = vmatpush1.msra.mxu0 0.0
        %326 = vmatprep.subr.mxu0 0.0
        %327 = vmatpush1.msra.mxu0 0.0
        %328 = vmatprep.subr.mxu0 0.0
        %329 = vmatpush1.msra.mxu0 0.0
        %330 = vmatprep.subr.mxu0 0.0
        %331 = vmatpush1.msra.mxu0 0.0
        %332 = vmatprep.subr.mxu0 0.0
        %333 = vmatpush1.msra.mxu0 0.0
        %334 = vmatprep.subr.mxu0 0.0
        %335 = vmatpush1.msra.mxu0 0.0
        %336 = vmatprep.subr.mxu0 0.0
        %337 = vmatpush1.msra.mxu0 0.0
        %338 = vmatprep.subr.mxu0 0.0
        %339 = vmatpush1.msra.mxu0 0.0
        %340 = vmatprep.subr.mxu0 0.0
        %341 = vmatpush1.msra.mxu0 0.0
        %342 = vmatprep.subr.mxu0 0.0
        %343 = vmatpush1.msra.mxu0 0.0
        %344 = vmatprep.subr.mxu0 0.0
        %345 = vmatpush1.msra.mxu0 0.0
        %346 = vmatprep.subr.mxu0 0.0
        %347 = vmatpush1.msra.mxu0 0.0
        %348 = vmatprep.subr.mxu0 0.0
        %349 = vmatpush1.msra.mxu0 0.0
        %350 = vmatprep.subr.mxu0 0.0
        %351 = vmatpush1.msra.mxu0 0.0
        %352 = vmatprep.subr.mxu0 0.0
        %353 = vmatpush1.msra.mxu0 0.0
        %354 = vmatprep.subr.mxu0 0.0
        %355 = vmatpush1.msra.mxu0 0.0
        %356 = vmatprep.subr.mxu0 0.0
        %357 = vmatpush1.msra.mxu0 0.0
        %358 = vmatprep.subr.mxu0 0.0
        %359 = vmatpush1.msra.mxu0 0.0
        %360 = vmatprep.subr.mxu0 0.0
        %361 = vmatpush1.msra.mxu0 0.0
        %362 = vmatprep.subr.mxu0 0.0
        %363 = vmatpush1.msra.mxu0 0.0
        %364 = vmatprep.subr.mxu0 0.0
        %365 = vmatpush1.msra.mxu0 0.0
        %366 = vmatprep.subr.mxu0 0.0
        %367 = vmatpush1.msra.mxu0 0.0
        %368 = vmatprep.mubr.f32.mxu0 0.0
        %369 = vmatmul.mubr.f32.gmra.mrb[0].mxu0 %v299
        %v370 = vpop.f32.mrb[0].mxu0
        %v371 = vadd.f32 0.0, %v370
        %v372 = vpop.f32.mrb[0].mxu0
        %v373 = vadd.f32 0.0, %v372
        %374 = vmatprep.mubr.f32.mxu0 0.0
        %375 = vmatmul.mubr.f32.gmra.mrb[0].mxu0 %v302
        %v376 = vpop.f32.mrb[0].mxu0
        %v377 = vadd.f32 0.0, %v376
        %v378 = vpop.f32.mrb[0].mxu0
        %v379 = vadd.f32 0.0, %v378
        %380 = vdwg.mxu0
        %v381 = vld [vmem:[%s1] sm:$0xff]
        %v382 = vld [vmem:[%s1 + $0x8] sm:$0xff]
        %v383 = vld [vmem:[%s1 + $0x10] sm:$0xff]
        %v384 = vld [vmem:[%s1 + $0x18] sm:$0xff]
        %v385 = vld [vmem:[%s1 + $0x20] sm:$0xff]
        %v386 = vld [vmem:[%s1 + $0x28] sm:$0xff]
        %v387 = vld [vmem:[%s1 + $0x30] sm:$0xff]
        %v388 = vld [vmem:[%s1 + $0x38] sm:$0xff]
        %v389 = vld [vmem:[%s1 + $0x40] sm:$0xff]
        %v390 = vld [vmem:[%s1 + $0x48] sm:$0xff]
        %v391 = vld [vmem:[%s1 + $0x50] sm:$0xff]
        %v392 = vld [vmem:[%s1 + $0x58] sm:$0xff]
        %v393 = vld [vmem:[%s1 + $0x60] sm:$0xff]
        %v394 = vld [vmem:[%s1 + $0x68] sm:$0xff]
        %v395 = vld [vmem:[%s1 + $0x70] sm:$0xff]
        %v396 = vld [vmem:[%s1 + $0x78] sm:$0xff]
        %v397 = vld [vmem:[%s3] sm:$0x3]
        %v399 = vlaneseq
        %v400 = vshrl.u32 %v399, 7
        %v401 = vsub.s32 0, %v400
        %v402 = vrot.slane %v397, %v401
        %v403 = vlaneseq
        %v404 = vshrl.u32 %v403, 7
        %v405 = vsub.s32 1, %v404
        %v406 = vrot.slane %v397, %v405
        %vm409 = vcmask 130048
        %v411 = vsel %vm409, %v381, 0
        %v414 = vsel %vm409, %v382, 0
        %v417 = vsel %vm409, %v383, 0
        %v420 = vsel %vm409, %v384, 0
        %v423 = vsel %vm409, %v385, 0
        %v426 = vsel %vm409, %v386, 0
        %v429 = vsel %vm409, %v387, 0
        %v432 = vsel %vm409, %v388, 0
        %v435 = vsel %vm409, %v389, 0
        %v438 = vsel %vm409, %v390, 0
        %v441 = vsel %vm409, %v391, 0
        %v444 = vsel %vm409, %v392, 0
        %v447 = vsel %vm409, %v393, 0
        %v450 = vsel %vm409, %v394, 0
        %v453 = vsel %vm409, %v395, 0
        %v456 = vsel %vm409, %v396, 0
        %458 = vmatprep.subr.mxu0 %v373
        %459 = vmatpush1.msra.mxu0 %v371
        %460 = vmatprep.subr.mxu0 %v379
        %461 = vmatpush1.msra.mxu0 %v377
        %462 = vmatprep.subr.mxu0 0.0
        %463 = vmatpush1.msra.mxu0 0.0
        %464 = vmatprep.subr.mxu0 0.0
        %465 = vmatpush1.msra.mxu0 0.0
        %466 = vmatprep.subr.mxu0 0.0
        %467 = vmatpush1.msra.mxu0 0.0
        %468 = vmatprep.subr.mxu0 0.0
        %469 = vmatpush1.msra.mxu0 0.0
        %470 = vmatprep.subr.mxu0 0.0
        %471 = vmatpush1.msra.mxu0 0.0
        %472 = vmatprep.subr.mxu0 0.0
        %473 = vmatpush1.msra.mxu0 0.0
        %474 = vmatprep.subr.mxu0 0.0
        %475 = vmatpush1.msra.mxu0 0.0
        %476 = vmatprep.subr.mxu0 0.0
        %477 = vmatpush1.msra.mxu0 0.0
        %478 = vmatprep.subr.mxu0 0.0
        %479 = vmatpush1.msra.mxu0 0.0
        %480 = vmatprep.subr.mxu0 0.0
        %481 = vmatpush1.msra.mxu0 0.0
        %482 = vmatprep.subr.mxu0 0.0
        %483 = vmatpush1.msra.mxu0 0.0
        %484 = vmatprep.subr.mxu0 0.0
        %485 = vmatpush1.msra.mxu0 0.0
        %486 = vmatprep.subr.mxu0 0.0
        %487 = vmatpush1.msra.mxu0 0.0
        %488 = vmatprep.subr.mxu0 0.0
        %489 = vmatpush1.msra.mxu0 0.0
        %490 = vmatprep.subr.mxu0 0.0
        %491 = vmatpush1.msra.mxu0 0.0
        %492 = vmatprep.subr.mxu0 0.0
        %493 = vmatpush1.msra.mxu0 0.0
        %494 = vmatprep.subr.mxu0 0.0
        %495 = vmatpush1.msra.mxu0 0.0
        %496 = vmatprep.subr.mxu0 0.0
        %497 = vmatpush1.msra.mxu0 0.0
        %498 = vmatprep.subr.mxu0 0.0
        %499 = vmatpush1.msra.mxu0 0.0
        %500 = vmatprep.subr.mxu0 0.0
        %501 = vmatpush1.msra.mxu0 0.0
        %502 = vmatprep.subr.mxu0 0.0
        %503 = vmatpush1.msra.mxu0 0.0
        %504 = vmatprep.subr.mxu0 0.0
        %505 = vmatpush1.msra.mxu0 0.0
        %506 = vmatprep.subr.mxu0 0.0
        %507 = vmatpush1.msra.mxu0 0.0
        %508 = vmatprep.subr.mxu0 0.0
        %509 = vmatpush1.msra.mxu0 0.0
        %510 = vmatprep.subr.mxu0 0.0
        %511 = vmatpush1.msra.mxu0 0.0
        %512 = vmatprep.subr.mxu0 0.0
        %513 = vmatpush1.msra.mxu0 0.0
        %514 = vmatprep.subr.mxu0 0.0
        %515 = vmatpush1.msra.mxu0 0.0
        %516 = vmatprep.subr.mxu0 0.0
        %517 = vmatpush1.msra.mxu0 0.0
        %518 = vmatprep.subr.mxu0 0.0
        %519 = vmatpush1.msra.mxu0 0.0
        %520 = vmatprep.subr.mxu0 0.0
        %521 = vmatpush1.msra.mxu0 0.0
        %522 = vmatprep.mubr.f32.mxu0 0.0
        %523 = vmatmul.mubr.f32.gmra.mrb[0].mxu0 %v411
        %v524 = vpop.f32.mrb[0].mxu0
        %v525 = vadd.f32 %v402, %v524
        %v526 = vpop.f32.mrb[0].mxu0
        %v527 = vadd.f32 %v406, %v526
        %528 = vmatprep.mubr.f32.mxu0 0.0
        %529 = vmatmul.mubr.f32.gmra.mrb[0].mxu0 %v414
        %v530 = vpop.f32.mrb[0].mxu0
        %v531 = vadd.f32 %v402, %v530
        %v532 = vpop.f32.mrb[0].mxu0
        %v533 = vadd.f32 %v406, %v532
        %534 = vmatprep.mubr.f32.mxu0 0.0
        %535 = vmatmul.mubr.f32.gmra.mrb[0].mxu0 %v417
        %v536 = vpop.f32.mrb[0].mxu0
        %v537 = vadd.f32 %v402, %v536
        %v538 = vpop.f32.mrb[0].mxu0
        %v539 = vadd.f32 %v406, %v538
        %540 = vmatprep.mubr.f32.mxu0 0.0
        %541 = vmatmul.mubr.f32.gmra.mrb[0].mxu0 %v420
        %v542 = vpop.f32.mrb[0].mxu0
        %v543 = vadd.f32 %v402, %v542
        %v544 = vpop.f32.mrb[0].mxu0
        %v545 = vadd.f32 %v406, %v544
        %546 = vmatprep.mubr.f32.mxu0 0.0
        %547 = vmatmul.mubr.f32.gmra.mrb[0].mxu0 %v423
        %v548 = vpop.f32.mrb[0].mxu0
        %v549 = vadd.f32 %v402, %v548
        %v550 = vpop.f32.mrb[0].mxu0
        %v551 = vadd.f32 %v406, %v550
        %552 = vmatprep.mubr.f32.mxu0 0.0
        %553 = vmatmul.mubr.f32.gmra.mrb[0].mxu0 %v426
        %v554 = vpop.f32.mrb[0].mxu0
        %v555 = vadd.f32 %v402, %v554
        %v556 = vpop.f32.mrb[0].mxu0
        %v557 = vadd.f32 %v406, %v556
        %558 = vmatprep.mubr.f32.mxu0 0.0
        %559 = vmatmul.mubr.f32.gmra.mrb[0].mxu0 %v429
        %v560 = vpop.f32.mrb[0].mxu0
        %v561 = vadd.f32 %v402, %v560
        %v562 = vpop.f32.mrb[0].mxu0
        %v563 = vadd.f32 %v406, %v562
        %564 = vmatprep.mubr.f32.mxu0 0.0
        %565 = vmatmul.mubr.f32.gmra.mrb[0].mxu0 %v432
        %v566 = vpop.f32.mrb[0].mxu0
        %v567 = vadd.f32 %v402, %v566
        %v568 = vpop.f32.mrb[0].mxu0
        %v569 = vadd.f32 %v406, %v568
        %570 = vmatprep.mubr.f32.mxu0 0.0
        %571 = vmatmul.mubr.f32.gmra.mrb[0].mxu0 %v435
        %v572 = vpop.f32.mrb[0].mxu0
        %v573 = vadd.f32 %v402, %v572
        %v574 = vpop.f32.mrb[0].mxu0
        %v575 = vadd.f32 %v406, %v574
        %576 = vmatprep.mubr.f32.mxu0 0.0
        %577 = vmatmul.mubr.f32.gmra.mrb[0].mxu0 %v438
        %v578 = vpop.f32.mrb[0].mxu0
        %v579 = vadd.f32 %v402, %v578
        %v580 = vpop.f32.mrb[0].mxu0
        %v581 = vadd.f32 %v406, %v580
        %582 = vmatprep.mubr.f32.mxu0 0.0
        %583 = vmatmul.mubr.f32.gmra.mrb[0].mxu0 %v441
        %v584 = vpop.f32.mrb[0].mxu0
        %v585 = vadd.f32 %v402, %v584
        %v586 = vpop.f32.mrb[0].mxu0
        %v587 = vadd.f32 %v406, %v586
        %588 = vmatprep.mubr.f32.mxu0 0.0
        %589 = vmatmul.mubr.f32.gmra.mrb[0].mxu0 %v444
        %v590 = vpop.f32.mrb[0].mxu0
        %v591 = vadd.f32 %v402, %v590
        %v592 = vpop.f32.mrb[0].mxu0
        %v593 = vadd.f32 %v406, %v592
        %594 = vmatprep.mubr.f32.mxu0 0.0
        %595 = vmatmul.mubr.f32.gmra.mrb[0].mxu0 %v447
        %v596 = vpop.f32.mrb[0].mxu0
        %v597 = vadd.f32 %v402, %v596
        %v598 = vpop.f32.mrb[0].mxu0
        %v599 = vadd.f32 %v406, %v598
        %600 = vmatprep.mubr.f32.mxu0 0.0
        %601 = vmatmul.mubr.f32.gmra.mrb[0].mxu0 %v450
        %v602 = vpop.f32.mrb[0].mxu0
        %v603 = vadd.f32 %v402, %v602
        %v604 = vpop.f32.mrb[0].mxu0
        %v605 = vadd.f32 %v406, %v604
        %606 = vmatprep.mubr.f32.mxu0 0.0
        %607 = vmatmul.mubr.f32.gmra.mrb[0].mxu0 %v453
        %v608 = vpop.f32.mrb[0].mxu0
        %v609 = vadd.f32 %v402, %v608
        %v610 = vpop.f32.mrb[0].mxu0
        %v611 = vadd.f32 %v406, %v610
        %612 = vmatprep.mubr.f32.mxu0 0.0
        %613 = vmatmul.mubr.f32.gmra.mrb[0].mxu0 %v456
        %v614 = vpop.f32.mrb[0].mxu0
        %v615 = vadd.f32 %v402, %v614
        %v616 = vpop.f32.mrb[0].mxu0
        %v617 = vadd.f32 %v406, %v616
        %618 = vdwg.mxu0
        %619 = vst [vmem:[%s260] sm:$0xff] %v525
        %620 = vst [vmem:[%s260 + $0x8] sm:$0xff] %v527
        %621 = vst [vmem:[%s260 + $0x10] sm:$0xff] %v531
        %622 = vst [vmem:[%s260 + $0x18] sm:$0xff] %v533
        %623 = vst [vmem:[%s260 + $0x20] sm:$0xff] %v537
        %624 = vst [vmem:[%s260 + $0x28] sm:$0xff] %v539
        %625 = vst [vmem:[%s260 + $0x30] sm:$0xff] %v543
        %626 = vst [vmem:[%s260 + $0x38] sm:$0xff] %v545
        %627 = vst [vmem:[%s260 + $0x40] sm:$0xff] %v549
        %628 = vst [vmem:[%s260 + $0x48] sm:$0xff] %v551
        %629 = vst [vmem:[%s260 + $0x50] sm:$0xff] %v555
        %630 = vst [vmem:[%s260 + $0x58] sm:$0xff] %v557
        %631 = vst [vmem:[%s260 + $0x60] sm:$0xff] %v561
        %632 = vst [vmem:[%s260 + $0x68] sm:$0xff] %v563
        %633 = vst [vmem:[%s260 + $0x70] sm:$0xff] %v567
        %634 = vst [vmem:[%s260 + $0x78] sm:$0xff] %v569
        %635 = vst [vmem:[%s260 + $0x80] sm:$0xff] %v573
        %636 = vst [vmem:[%s260 + $0x88] sm:$0xff] %v575
        %637 = vst [vmem:[%s260 + $0x90] sm:$0xff] %v579
        %638 = vst [vmem:[%s260 + $0x98] sm:$0xff] %v581
        %639 = vst [vmem:[%s260 + $0xa0] sm:$0xff] %v585
        %640 = vst [vmem:[%s260 + $0xa8] sm:$0xff] %v587
        %641 = vst [vmem:[%s260 + $0xb0] sm:$0xff] %v591
        %642 = vst [vmem:[%s260 + $0xb8] sm:$0xff] %v593
        %643 = vst [vmem:[%s260 + $0xc0] sm:$0xff] %v597
        %644 = vst [vmem:[%s260 + $0xc8] sm:$0xff] %v599
        %645 = vst [vmem:[%s260 + $0xd0] sm:$0xff] %v603
        %646 = vst [vmem:[%s260 + $0xd8] sm:$0xff] %v605
        %647 = vst [vmem:[%s260 + $0xe0] sm:$0xff] %v609
        %648 = vst [vmem:[%s260 + $0xe8] sm:$0xff] %v611
        %649 = vst [vmem:[%s260 + $0xf0] sm:$0xff] %v615
        %650 = vst [vmem:[%s260 + $0xf8] sm:$0xff] %v617
        %v651 = vmax.f32 %v525, %v527
        %652 = vmax.xlane.f32.xlu0 %v651
        %v653 = vpop.xlane.xlu0 %652
        %v654 = vmax.f32 %v531, %v533
        %655 = vmax.xlane.f32.xlu0 %v654
        %v656 = vpop.xlane.xlu0 %655
        %v657 = vmax.f32 %v537, %v539
        %658 = vmax.xlane.f32.xlu0 %v657
        %v659 = vpop.xlane.xlu0 %658
        %v660 = vmax.f32 %v543, %v545
        %661 = vmax.xlane.f32.xlu0 %v660
        %v662 = vpop.xlane.xlu0 %661
        %v663 = vmax.f32 %v549, %v551
        %664 = vmax.xlane.f32.xlu0 %v663
        %v665 = vpop.xlane.xlu0 %664
        %v666 = vmax.f32 %v555, %v557
        %667 = vmax.xlane.f32.xlu0 %v666
        %v668 = vpop.xlane.xlu0 %667
        %v669 = vmax.f32 %v561, %v563
        %670 = vmax.xlane.f32.xlu0 %v669
        %v671 = vpop.xlane.xlu0 %670
        %v672 = vmax.f32 %v567, %v569
        %673 = vmax.xlane.f32.xlu0 %v672
        %v674 = vpop.xlane.xlu0 %673
        %v675 = vmax.f32 %v573, %v575
        %676 = vmax.xlane.f32.xlu0 %v675
        %v677 = vpop.xlane.xlu0 %676
        %v678 = vmax.f32 %v579, %v581
        %679 = vmax.xlane.f32.xlu0 %v678
        %v680 = vpop.xlane.xlu0 %679
        %v681 = vmax.f32 %v585, %v587
        %682 = vmax.xlane.f32.xlu0 %v681
        %v683 = vpop.xlane.xlu0 %682
        %v684 = vmax.f32 %v591, %v593
        %685 = vmax.xlane.f32.xlu0 %v684
        %v686 = vpop.xlane.xlu0 %685
        %v687 = vmax.f32 %v597, %v599
        %688 = vmax.xlane.f32.xlu0 %v687
        %v689 = vpop.xlane.xlu0 %688
        %v690 = vmax.f32 %v603, %v605
        %691 = vmax.xlane.f32.xlu0 %v690
        %v692 = vpop.xlane.xlu0 %691
        %v693 = vmax.f32 %v609, %v611
        %694 = vmax.xlane.f32.xlu0 %v693
        %v695 = vpop.xlane.xlu0 %694
        %v696 = vmax.f32 %v615, %v617
        %697 = vmax.xlane.f32.xlu0 %v696
        %v698 = vpop.xlane.xlu0 %697
        %v699 = vsub.f32 %v525, %v653
        %v700 = vsub.f32 %v527, %v653
        %v701 = vsub.f32 %v531, %v656
        %v702 = vsub.f32 %v533, %v656
        %v703 = vsub.f32 %v537, %v659
        %v704 = vsub.f32 %v539, %v659
        %v705 = vsub.f32 %v543, %v662
        %v706 = vsub.f32 %v545, %v662
        %v707 = vsub.f32 %v549, %v665
        %v708 = vsub.f32 %v551, %v665
        %v709 = vsub.f32 %v555, %v668
        %v710 = vsub.f32 %v557, %v668
        %v711 = vsub.f32 %v561, %v671
        %v712 = vsub.f32 %v563, %v671
        %v713 = vsub.f32 %v567, %v674
        %v714 = vsub.f32 %v569, %v674
        %v715 = vsub.f32 %v573, %v677
        %v716 = vsub.f32 %v575, %v677
        %v717 = vsub.f32 %v579, %v680
        %v718 = vsub.f32 %v581, %v680
        %v719 = vsub.f32 %v585, %v683
        %v720 = vsub.f32 %v587, %v683
        %v721 = vsub.f32 %v591, %v686
        %v722 = vsub.f32 %v593, %v686
        %v723 = vsub.f32 %v597, %v689
        %v724 = vsub.f32 %v599, %v689
        %v725 = vsub.f32 %v603, %v692
        %v726 = vsub.f32 %v605, %v692
        %v727 = vsub.f32 %v609, %v695
        %v728 = vsub.f32 %v611, %v695
        %v729 = vsub.f32 %v615, %v698
        %v730 = vsub.f32 %v617, %v698
        %v731 = vmul.f32 %v699, 1.442695
        %v732 = vpow.pop %v731
        %v733 = vmul.f32 %v700, 1.442695
        %v734 = vpow.pop %v733
        %v735 = vmul.f32 %v701, 1.442695
        %v736 = vpow.pop %v735
        %v737 = vmul.f32 %v702, 1.442695
        %v738 = vpow.pop %v737
        %v739 = vmul.f32 %v703, 1.442695
        %v740 = vpow.pop %v739
        %v741 = vmul.f32 %v704, 1.442695
        %v742 = vpow.pop %v741
        %v743 = vmul.f32 %v705, 1.442695
        %v744 = vpow.pop %v743
        %v745 = vmul.f32 %v706, 1.442695
        %v746 = vpow.pop %v745
        %v747 = vmul.f32 %v707, 1.442695
        %v748 = vpow.pop %v747
        %v749 = vmul.f32 %v708, 1.442695
        %v750 = vpow.pop %v749
        %v751 = vmul.f32 %v709, 1.442695
        %v752 = vpow.pop %v751
        %v753 = vmul.f32 %v710, 1.442695
        %v754 = vpow.pop %v753
        %v755 = vmul.f32 %v711, 1.442695
        %v756 = vpow.pop %v755
        %v757 = vmul.f32 %v712, 1.442695
        %v758 = vpow.pop %v757
        %v759 = vmul.f32 %v713, 1.442695
        %v760 = vpow.pop %v759
        %v761 = vmul.f32 %v714, 1.442695
        %v762 = vpow.pop %v761
        %v763 = vmul.f32 %v715, 1.442695
        %v764 = vpow.pop %v763
        %v765 = vmul.f32 %v716, 1.442695
        %v766 = vpow.pop %v765
        %v767 = vmul.f32 %v717, 1.442695
        %v768 = vpow.pop %v767
        %v769 = vmul.f32 %v718, 1.442695
        %v770 = vpow.pop %v769
        %v771 = vmul.f32 %v719, 1.442695
        %v772 = vpow.pop %v771
        %v773 = vmul.f32 %v720, 1.442695
        %v774 = vpow.pop %v773
        %v775 = vmul.f32 %v721, 1.442695
        %v776 = vpow.pop %v775
        %v777 = vmul.f32 %v722, 1.442695
        %v778 = vpow.pop %v777
        %v779 = vmul.f32 %v723, 1.442695
        %v780 = vpow.pop %v779
        %v781 = vmul.f32 %v724, 1.442695
        %v782 = vpow.pop %v781
        %v783 = vmul.f32 %v725, 1.442695
        %v784 = vpow.pop %v783
        %v785 = vmul.f32 %v726, 1.442695
        %v786 = vpow.pop %v785
        %v787 = vmul.f32 %v727, 1.442695
        %v788 = vpow.pop %v787
        %v789 = vmul.f32 %v728, 1.442695
        %v790 = vpow.pop %v789
        %v791 = vmul.f32 %v729, 1.442695
        %v792 = vpow.pop %v791
        %v793 = vmul.f32 %v730, 1.442695
        %v794 = vpow.pop %v793
        %v795 = vadd.f32 %v732, %v734
        %796 = vadd.xlane.f32.xlu0 %v795
        %v797 = vpop.xlane.xlu0 %796
        %v798 = vadd.f32 %v736, %v738
        %799 = vadd.xlane.f32.xlu0 %v798
        %v800 = vpop.xlane.xlu0 %799
        %v801 = vadd.f32 %v740, %v742
        %802 = vadd.xlane.f32.xlu0 %v801
        %v803 = vpop.xlane.xlu0 %802
        %v804 = vadd.f32 %v744, %v746
        %805 = vadd.xlane.f32.xlu0 %v804
        %v806 = vpop.xlane.xlu0 %805
        %v807 = vadd.f32 %v748, %v750
        %808 = vadd.xlane.f32.xlu0 %v807
        %v809 = vpop.xlane.xlu0 %808
        %v810 = vadd.f32 %v752, %v754
        %811 = vadd.xlane.f32.xlu0 %v810
        %v812 = vpop.xlane.xlu0 %811
        %v813 = vadd.f32 %v756, %v758
        %814 = vadd.xlane.f32.xlu0 %v813
        %v815 = vpop.xlane.xlu0 %814
        %v816 = vadd.f32 %v760, %v762
        %817 = vadd.xlane.f32.xlu0 %v816
        %v818 = vpop.xlane.xlu0 %817
        %v819 = vadd.f32 %v764, %v766
        %820 = vadd.xlane.f32.xlu0 %v819
        %v821 = vpop.xlane.xlu0 %820
        %v822 = vadd.f32 %v768, %v770
        %823 = vadd.xlane.f32.xlu0 %v822
        %v824 = vpop.xlane.xlu0 %823
        %v825 = vadd.f32 %v772, %v774
        %826 = vadd.xlane.f32.xlu0 %v825
        %v827 = vpop.xlane.xlu0 %826
        %v828 = vadd.f32 %v776, %v778
        %829 = vadd.xlane.f32.xlu0 %v828
        %v830 = vpop.xlane.xlu0 %829
        %v831 = vadd.f32 %v780, %v782
        %832 = vadd.xlane.f32.xlu0 %v831
        %v833 = vpop.xlane.xlu0 %832
        %v834 = vadd.f32 %v784, %v786
        %835 = vadd.xlane.f32.xlu0 %v834
        %v836 = vpop.xlane.xlu0 %835
        %v837 = vadd.f32 %v788, %v790
        %838 = vadd.xlane.f32.xlu0 %v837
        %v839 = vpop.xlane.xlu0 %838
        %v840 = vadd.f32 %v792, %v794
        %841 = vadd.xlane.f32.xlu0 %v840
        %v842 = vpop.xlane.xlu0 %841
        %v843 = vlog2.pop %v797
        %v844 = vmul.f32 %v843, 0.6931472
        %v845 = vlog2.pop %v800
        %v846 = vmul.f32 %v845, 0.6931472
        %v847 = vlog2.pop %v803
        %v848 = vmul.f32 %v847, 0.6931472
        %v849 = vlog2.pop %v806
        %v850 = vmul.f32 %v849, 0.6931472
        %v851 = vlog2.pop %v809
        %v852 = vmul.f32 %v851, 0.6931472
        %v853 = vlog2.pop %v812
        %v854 = vmul.f32 %v853, 0.6931472
        %v855 = vlog2.pop %v815
        %v856 = vmul.f32 %v855, 0.6931472
        %v857 = vlog2.pop %v818
        %v858 = vmul.f32 %v857, 0.6931472
        %v859 = vlog2.pop %v821
        %v860 = vmul.f32 %v859, 0.6931472
        %v861 = vlog2.pop %v824
        %v862 = vmul.f32 %v861, 0.6931472
        %v863 = vlog2.pop %v827
        %v864 = vmul.f32 %v863, 0.6931472
        %v865 = vlog2.pop %v830
        %v866 = vmul.f32 %v865, 0.6931472
        %v867 = vlog2.pop %v833
        %v868 = vmul.f32 %v867, 0.6931472
        %v869 = vlog2.pop %v836
        %v870 = vmul.f32 %v869, 0.6931472
        %v871 = vlog2.pop %v839
        %v872 = vmul.f32 %v871, 0.6931472
        %v873 = vlog2.pop %v842
        %v874 = vmul.f32 %v873, 0.6931472
        %v875 = vadd.f32 %v653, %v844
        %v876 = vadd.f32 %v656, %v846
        %v877 = vadd.f32 %v659, %v848
        %v878 = vadd.f32 %v662, %v850
        %v879 = vadd.f32 %v665, %v852
        %v880 = vadd.f32 %v668, %v854
        %v881 = vadd.f32 %v671, %v856
        %v882 = vadd.f32 %v674, %v858
        %v883 = vadd.f32 %v677, %v860
        %v884 = vadd.f32 %v680, %v862
        %v885 = vadd.f32 %v683, %v864
        %v886 = vadd.f32 %v686, %v866
        %v887 = vadd.f32 %v689, %v868
        %v888 = vadd.f32 %v692, %v870
        %v889 = vadd.f32 %v695, %v872
        %v890 = vadd.f32 %v698, %v874
        %v891 = vlaneseq
        %v892 = vand.u32 %v891, 127
        %v893 = vadd.s32 %v892, 128
        %v894 = vld [vmem:[%s277] sm:$0xff]
        %v895 = vld [vmem:[%s277 + $0x8] sm:$0xff]
        %v896 = vld [vmem:[%s277 + $0x10] sm:$0xff]
        %v897 = vld [vmem:[%s277 + $0x18] sm:$0xff]
        %v898 = vld [vmem:[%s277 + $0x20] sm:$0xff]
        %v899 = vld [vmem:[%s277 + $0x28] sm:$0xff]
        %v900 = vld [vmem:[%s277 + $0x30] sm:$0xff]
        %v901 = vld [vmem:[%s277 + $0x38] sm:$0xff]
        %v902 = vld [vmem:[%s277 + $0x40] sm:$0xff]
        %v903 = vld [vmem:[%s277 + $0x48] sm:$0xff]
        %v904 = vld [vmem:[%s277 + $0x50] sm:$0xff]
        %v905 = vld [vmem:[%s277 + $0x58] sm:$0xff]
        %v906 = vld [vmem:[%s277 + $0x60] sm:$0xff]
        %v907 = vld [vmem:[%s277 + $0x68] sm:$0xff]
        %v908 = vld [vmem:[%s277 + $0x70] sm:$0xff]
        %v909 = vld [vmem:[%s277 + $0x78] sm:$0xff]
        %910 = vset.pattern.permute.xlu0 0
        %911 = vperm.xlu0 %910, %v894
        %v912 = vpop.permute.xlu0 %911
        %913 = vset.pattern.permute.xlu0 0
        %914 = vperm.xlu0 %913, %v895
        %v915 = vpop.permute.xlu0 %914
        %916 = vset.pattern.permute.xlu0 0
        %917 = vperm.xlu0 %916, %v896
        %v918 = vpop.permute.xlu0 %917
        %919 = vset.pattern.permute.xlu0 0
        %920 = vperm.xlu0 %919, %v897
        %v921 = vpop.permute.xlu0 %920
        %922 = vset.pattern.permute.xlu0 0
        %923 = vperm.xlu0 %922, %v898
        %v924 = vpop.permute.xlu0 %923
        %925 = vset.pattern.permute.xlu0 0
        %926 = vperm.xlu0 %925, %v899
        %v927 = vpop.permute.xlu0 %926
        %928 = vset.pattern.permute.xlu0 0
        %929 = vperm.xlu0 %928, %v900
        %v930 = vpop.permute.xlu0 %929
        %931 = vset.pattern.permute.xlu0 0
        %932 = vperm.xlu0 %931, %v901
        %v933 = vpop.permute.xlu0 %932
        %934 = vset.pattern.permute.xlu0 0
        %935 = vperm.xlu0 %934, %v902
        %v936 = vpop.permute.xlu0 %935
        %937 = vset.pattern.permute.xlu0 0
        %938 = vperm.xlu0 %937, %v903
        %v939 = vpop.permute.xlu0 %938
        %940 = vset.pattern.permute.xlu0 0
        %941 = vperm.xlu0 %940, %v904
        %v942 = vpop.permute.xlu0 %941
        %943 = vset.pattern.permute.xlu0 0
        %944 = vperm.xlu0 %943, %v905
        %v945 = vpop.permute.xlu0 %944
        %946 = vset.pattern.permute.xlu0 0
        %947 = vperm.xlu0 %946, %v906
        %v948 = vpop.permute.xlu0 %947
        %949 = vset.pattern.permute.xlu0 0
        %950 = vperm.xlu0 %949, %v907
        %v951 = vpop.permute.xlu0 %950
        %952 = vset.pattern.permute.xlu0 0
        %953 = vperm.xlu0 %952, %v908
        %v954 = vpop.permute.xlu0 %953
        %955 = vset.pattern.permute.xlu0 0
        %956 = vperm.xlu0 %955, %v909
        %v957 = vpop.permute.xlu0 %956
        %vm958 = vcmp.eq.s32.totalorder %v892, %v912
        %vm959 = vcmp.eq.s32.totalorder %v893, %v912
        %vm960 = vcmp.eq.s32.totalorder %v892, %v915
        %vm961 = vcmp.eq.s32.totalorder %v893, %v915
        %vm962 = vcmp.eq.s32.totalorder %v892, %v918
        %vm963 = vcmp.eq.s32.totalorder %v893, %v918
        %vm964 = vcmp.eq.s32.totalorder %v892, %v921
        %vm965 = vcmp.eq.s32.totalorder %v893, %v921
        %vm966 = vcmp.eq.s32.totalorder %v892, %v924
        %vm967 = vcmp.eq.s32.totalorder %v893, %v924
        %vm968 = vcmp.eq.s32.totalorder %v892, %v927
        %vm969 = vcmp.eq.s32.totalorder %v893, %v927
        %vm970 = vcmp.eq.s32.totalorder %v892, %v930
        %vm971 = vcmp.eq.s32.totalorder %v893, %v930
        %vm972 = vcmp.eq.s32.totalorder %v892, %v933
        %vm973 = vcmp.eq.s32.totalorder %v893, %v933
        %vm974 = vcmp.eq.s32.totalorder %v892, %v936
        %vm975 = vcmp.eq.s32.totalorder %v893, %v936
        %vm976 = vcmp.eq.s32.totalorder %v892, %v939
        %vm977 = vcmp.eq.s32.totalorder %v893, %v939
        %vm978 = vcmp.eq.s32.totalorder %v892, %v942
        %vm979 = vcmp.eq.s32.totalorder %v893, %v942
        %vm980 = vcmp.eq.s32.totalorder %v892, %v945
        %vm981 = vcmp.eq.s32.totalorder %v893, %v945
        %vm982 = vcmp.eq.s32.totalorder %v892, %v948
        %vm983 = vcmp.eq.s32.totalorder %v893, %v948
        %vm984 = vcmp.eq.s32.totalorder %v892, %v951
        %vm985 = vcmp.eq.s32.totalorder %v893, %v951
        %vm986 = vcmp.eq.s32.totalorder %v892, %v954
        %vm987 = vcmp.eq.s32.totalorder %v893, %v954
        %vm988 = vcmp.eq.s32.totalorder %v892, %v957
        %vm989 = vcmp.eq.s32.totalorder %v893, %v957
        %v990 = vsel %vm958, %v525, 0.0
        %v991 = vsel %vm959, %v527, 0.0
        %v992 = vsel %vm960, %v531, 0.0
        %v993 = vsel %vm961, %v533, 0.0
        %v994 = vsel %vm962, %v537, 0.0
        %v995 = vsel %vm963, %v539, 0.0
        %v996 = vsel %vm964, %v543, 0.0
        %v997 = vsel %vm965, %v545, 0.0
        %v998 = vsel %vm966, %v549, 0.0
        %v999 = vsel %vm967, %v551, 0.0
        %v1000 = vsel %vm968, %v555, 0.0
        %v1001 = vsel %vm969, %v557, 0.0
        %v1002 = vsel %vm970, %v561, 0.0
        %v1003 = vsel %vm971, %v563, 0.0
        %v1004 = vsel %vm972, %v567, 0.0
        %v1005 = vsel %vm973, %v569, 0.0
        %v1006 = vsel %vm974, %v573, 0.0
        %v1007 = vsel %vm975, %v575, 0.0
        %v1008 = vsel %vm976, %v579, 0.0
        %v1009 = vsel %vm977, %v581, 0.0
        %v1010 = vsel %vm978, %v585, 0.0
        %v1011 = vsel %vm979, %v587, 0.0
        %v1012 = vsel %vm980, %v591, 0.0
        %v1013 = vsel %vm981, %v593, 0.0
        %v1014 = vsel %vm982, %v597, 0.0
        %v1015 = vsel %vm983, %v599, 0.0
        %v1016 = vsel %vm984, %v603, 0.0
        %v1017 = vsel %vm985, %v605, 0.0
        %v1018 = vsel %vm986, %v609, 0.0
        %v1019 = vsel %vm987, %v611, 0.0
        %v1020 = vsel %vm988, %v615, 0.0
        %v1021 = vsel %vm989, %v617, 0.0
        %v1022 = vadd.f32 %v990, %v991
        %1023 = vadd.xlane.f32.xlu0 %v1022
        %v1024 = vpop.xlane.xlu0 %1023
        %v1025 = vadd.f32 %v992, %v993
        %1026 = vadd.xlane.f32.xlu0 %v1025
        %v1027 = vpop.xlane.xlu0 %1026
        %v1028 = vadd.f32 %v994, %v995
        %1029 = vadd.xlane.f32.xlu0 %v1028
        %v1030 = vpop.xlane.xlu0 %1029
        %v1031 = vadd.f32 %v996, %v997
        %1032 = vadd.xlane.f32.xlu0 %v1031
        %v1033 = vpop.xlane.xlu0 %1032
        %v1034 = vadd.f32 %v998, %v999
        %1035 = vadd.xlane.f32.xlu0 %v1034
        %v1036 = vpop.xlane.xlu0 %1035
        %v1037 = vadd.f32 %v1000, %v1001
        %1038 = vadd.xlane.f32.xlu0 %v1037
        %v1039 = vpop.xlane.xlu0 %1038
        %v1040 = vadd.f32 %v1002, %v1003
        %1041 = vadd.xlane.f32.xlu0 %v1040
        %v1042 = vpop.xlane.xlu0 %1041
        %v1043 = vadd.f32 %v1004, %v1005
        %1044 = vadd.xlane.f32.xlu0 %v1043
        %v1045 = vpop.xlane.xlu0 %1044
        %v1046 = vadd.f32 %v1006, %v1007
        %1047 = vadd.xlane.f32.xlu0 %v1046
        %v1048 = vpop.xlane.xlu0 %1047
        %v1049 = vadd.f32 %v1008, %v1009
        %1050 = vadd.xlane.f32.xlu0 %v1049
        %v1051 = vpop.xlane.xlu0 %1050
        %v1052 = vadd.f32 %v1010, %v1011
        %1053 = vadd.xlane.f32.xlu0 %v1052
        %v1054 = vpop.xlane.xlu0 %1053
        %v1055 = vadd.f32 %v1012, %v1013
        %1056 = vadd.xlane.f32.xlu0 %v1055
        %v1057 = vpop.xlane.xlu0 %1056
        %v1058 = vadd.f32 %v1014, %v1015
        %1059 = vadd.xlane.f32.xlu0 %v1058
        %v1060 = vpop.xlane.xlu0 %1059
        %v1061 = vadd.f32 %v1016, %v1017
        %1062 = vadd.xlane.f32.xlu0 %v1061
        %v1063 = vpop.xlane.xlu0 %1062
        %v1064 = vadd.f32 %v1018, %v1019
        %1065 = vadd.xlane.f32.xlu0 %v1064
        %v1066 = vpop.xlane.xlu0 %1065
        %v1067 = vadd.f32 %v1020, %v1021
        %1068 = vadd.xlane.f32.xlu0 %v1067
        %v1069 = vpop.xlane.xlu0 %1068
        %v1070 = vsub.f32 %v875, %v1024
        %v1071 = vsub.f32 %v876, %v1027
        %v1072 = vsub.f32 %v877, %v1030
        %v1073 = vsub.f32 %v878, %v1033
        %v1074 = vsub.f32 %v879, %v1036
        %v1075 = vsub.f32 %v880, %v1039
        %v1076 = vsub.f32 %v881, %v1042
        %v1077 = vsub.f32 %v882, %v1045
        %v1078 = vsub.f32 %v883, %v1048
        %v1079 = vsub.f32 %v884, %v1051
        %v1080 = vsub.f32 %v885, %v1054
        %v1081 = vsub.f32 %v886, %v1057
        %v1082 = vsub.f32 %v887, %v1060
        %v1083 = vsub.f32 %v888, %v1063
        %v1084 = vsub.f32 %v889, %v1066
        %v1085 = vsub.f32 %v890, %v1069
        %vm1086 = vcmask 7168
        %1087 = vst.msk [vmem:[%s282] sm:$0xff] %vm1086, %v1070
        %1088 = vst.msk [vmem:[%s282 + $0x8] sm:$0xff] %vm1086, %v1071
        %1089 = vst.msk [vmem:[%s282 + $0x10] sm:$0xff] %vm1086, %v1072
        %1090 = vst.msk [vmem:[%s282 + $0x18] sm:$0xff] %vm1086, %v1073
        %1091 = vst.msk [vmem:[%s282 + $0x20] sm:$0xff] %vm1086, %v1074
        %1092 = vst.msk [vmem:[%s282 + $0x28] sm:$0xff] %vm1086, %v1075
        %1093 = vst.msk [vmem:[%s282 + $0x30] sm:$0xff] %vm1086, %v1076
        %1094 = vst.msk [vmem:[%s282 + $0x38] sm:$0xff] %vm1086, %v1077
        %1095 = vst.msk [vmem:[%s282 + $0x40] sm:$0xff] %vm1086, %v1078
        %1096 = vst.msk [vmem:[%s282 + $0x48] sm:$0xff] %vm1086, %v1079
        %1097 = vst.msk [vmem:[%s282 + $0x50] sm:$0xff] %vm1086, %v1080
        %1098 = vst.msk [vmem:[%s282 + $0x58] sm:$0xff] %vm1086, %v1081
        %1099 = vst.msk [vmem:[%s282 + $0x60] sm:$0xff] %vm1086, %v1082
        %1100 = vst.msk [vmem:[%s282 + $0x68] sm:$0xff] %vm1086, %v1083
        %1101 = vst.msk [vmem:[%s282 + $0x70] sm:$0xff] %vm1086, %v1084
        %1102 = vst.msk [vmem:[%s282 + $0x78] sm:$0xff] %vm1086, %v1085
        %s1103 = sand.u32 %s144, 1
        %s1104 = scalar_lea.sflag [#allocation3], %s1103
        %s1105 = sand.u32 %s144, 1
        %s1106 = smul.addr %s1105, 256
        %s1107 = scalar_lea.vmem [#allocation2], %s1106
        %p1108 = scmp.lt.s32.totalorder %s21, 1
        %s1109 = scalar_select %p1108, %s21, 1
        %s1110 = smul.addr %s1109, 16
        %s1111 = smul.addr %s1110, 8
        %s1112 = scalar_lea.vmem %s6, %s1111
        // Predicated region
        $region41: #{multimodal_forward.1} parent=39 // pred_check
          %p1113 = pneg %p154
        $region42: #{multimodal_forward.1} parent=39 // pred_check_branch
          %1115 = sbr.rel (%p1113) target = $region44
        $region43: #{multimodal_forward.1} parent=39 // pred_region
          %s1117 = ssub.s32 4096, 4096
          %1118 = vsyncadd %s1104, %s1117
          %s1119 = smul.addr %s21, 32
          %s1120 = smul.addr %s1119, 128
          %s1121 = scalar_lea.hbm %s5, %s1120
          %s1122 = sshll.u32 %s1107, 4
          %s1123 = int_to_ptr.vmem [resolvable:$true] %s1122
          %1128 = dma.vmem_to_hbm [thread:$0]  %s1123, 4096, %s1121, %s1104, 256, 256, 16
        $region44: #{multimodal_forward.1} parent=39 // pred_fallthru
          _
        // Predicated region
        $region45: #{multimodal_forward.1} parent=39 // pred_check
          %p1129 = pneg %p180
        $region46: #{multimodal_forward.1} parent=39 // pred_check_branch
          %1131 = sbr.rel (%p1129) target = $region48
        $region47: #{multimodal_forward.1} parent=39 // pred_region
          _
        $region48: #{multimodal_forward.1} parent=39 // pred_fallthru
          _
      $region40: #{multimodal_forward.1} parent=5 // pred_fallthru
        _
      %p1132 = scmp.le.s32.totalorder 2, %s16
      // Predicated region
      $region49: #{multimodal_forward.1} parent=5 // pred_check
        %p1133 = pneg %p1132
      $region50: #{multimodal_forward.1} parent=5 // pred_check_branch
        %1135 = sbr.rel (%p1133) target = $region52
      $region51: #{multimodal_forward.1} parent=5 // pred_region
        %s1136 = ssub.s32 %s16, 2
        // Predicated region
        $region53: #{multimodal_forward.1} parent=51 // pred_check
          %p1137 = pneg %p160
        $region54: #{multimodal_forward.1} parent=51 // pred_check_branch
          %1139 = sbr.rel (%p1137) target = $region56
        $region55: #{multimodal_forward.1} parent=51 // pred_region
          %s1140 = sand.u32 %s145, 1
          %s1141 = scalar_lea.sflag [#allocation3], %s1140
          %s1142 = sand.u32 %s145, 1
          %s1143 = smul.addr %s1142, 256
          %s1144 = scalar_lea.vmem [#allocation2], %s1143
          %1145 = dma.done %s1141, 4096
        $region56: #{multimodal_forward.1} parent=51 // pred_fallthru
          _
        // Predicated region
        $region57: #{multimodal_forward.1} parent=51 // pred_check
          %p1146 = pneg %p186
        $region58: #{multimodal_forward.1} parent=51 // pred_check_branch
          %1148 = sbr.rel (%p1146) target = $region60
        $region59: #{multimodal_forward.1} parent=51 // pred_region
          %p1149 = scmp.lt.s32.totalorder %s22, 1
          %s1150 = scalar_select %p1149, %s22, 1
          %s1151 = smul.addr %s1150, 16
          %s1152 = smul.addr %s1151, 8
          %s1153 = scalar_lea.vmem %s6, %s1152
        $region60: #{multimodal_forward.1} parent=51 // pred_fallthru
          _
      $region52: #{multimodal_forward.1} parent=5 // pred_fallthru
        _
    $region6: #{multimodal_forward.1} parent=1 // loop_footer
      %s20 = sadd.s32 1, %s16
    $region7: #{multimodal_forward.1} parent=1 // loop_footer_branch
      %15 = sbr.rel target = $region3
    $region8: #{multimodal_forward.1} parent=1 // loop_exit
      _
    %1154 = vsyncpa [#allocation3], 1
    %s1155 = scalar_lea.sflag [#allocation3], 1
    %1156 = vsyncpa %s1155, 1

</llo_original>
